<compile_context>
chip_gen: v7x
topology: tpu7x:2x2x1
jax: 0.10.0
libtpu: 0.0.40
codegen_flags: <defaults>
</compile_context>

<pallas_src>
import functools
import math

import jax
import jax.numpy as jnp
from jax.experimental import pallas as pl
from jax.experimental.pallas import tpu as pltpu

EPS = 1e-12


def _vn_leaky_relu_kernel(x_ref, w_ref, rs_ref, rb_ref, o_ref, *, bb, approx_recip):
    # x_ref : (Bb, 3C, TN)  merged-channel block (row = c*3 + k), N on lanes
    # w_ref : (3C, 3C)      kron(w_eff, I3)                 -> channel Linear
    # rs_ref: (C, 3C)       kron(I_C, ones(1,3))            -> "3"-axis sum
    # rb_ref: (3C, C)       (1-slope) * kron(I_C, ones(3,1))-> broadcast + scale
    w = w_ref[...]                       # native matmul dtype (bf16 or f32)
    rs = rs_ref[...]                     # f32
    rb = rb_ref[...]                     # f32
    for i in range(bb):                  # short static unroll over the batch sub-block
        x = x_ref[i]                                                    # (3C, TN)
        xf = x.astype(jnp.float32)
        # d[c*3+k, n] = sum_c' weight[c, c'] * x[c'*3+k, n]
        d = jnp.dot(w, x, preferred_element_type=jnp.float32)           # (3C, TN)
        # Group-of-3 reductions, now at (C, TN) (factored S = R_b @ R_s).
        dot = jnp.dot(rs, xf * d, preferred_element_type=jnp.float32)   # (C, TN)
        dns = jnp.dot(rs, d * d, preferred_element_type=jnp.float32)    # (C, TN)
        inv = pl.reciprocal(dns + EPS, approx=approx_recip)             # EUP
        coef = jnp.where(dot < 0.0, dot * inv, 0.0)                     # (C, TN)
        # Broadcast back to the 3 vector components; (1-slope) folded into rb.
        adj = jnp.dot(rb, coef, preferred_element_type=jnp.float32)     # (3C, TN)
        o_ref[i] = (xf - adj * d).astype(o_ref.dtype)


def _vmem_budget_bytes():
    """Generation-aware VMEM budget (~48 MiB on v7x, ~96 MiB on v5e/v6e)."""
    cap = 64 << 20  # smallest per-TensorCore VMEM across v5e/v6e/v7x
    try:
        info_fn = getattr(pltpu, "get_tpu_info", None)
        if info_fn is not None:
            cap = int(info_fn().vmem_capacity_bytes)
    except Exception:
        pass
    return max(16 << 20, min((cap * 3) // 4, 96 << 20))


def _choose_tile_n(n_pad128, fits, cap=4096):
    """Largest lane tile (multiple of 128, <= cap) that fits VMEM and wastes at
    most ~12.5% of the (already 128-padded) N axis to tile padding."""
    t = min(n_pad128, cap)
    t -= t % 128
    while t > 128:
        waste = pl.cdiv(n_pad128, t) * t - n_pad128
        if fits(1, t) and waste * 8 <= n_pad128:
            return t
        t -= 128
    return 128


def _choose_batch_block(B, threeC, tn, dsize, n_tiles, fits):
    """Grow the batch sub-block until each grid step moves >= ~2 MiB, without
    exceeding VMEM or starving the (v7x two-TC) parallel grid of steps."""
    total_steps = B * n_tiles
    min_steps = min(8, total_steps)
    bb = 1
    for cand in range(1, B + 1):
        if B % cand:
            continue
        if (B // cand) * n_tiles < min_steps or not fits(cand, tn):
            break
        bb = cand
        if 2 * cand * threeC * tn * dsize >= (2 << 20):
            break
    return bb


def vn_leaky_relu(x, weight, negative_slope=0.2, *, tile_n=None, batch_block=None,
                  approx_recip=True):
    """x: [B, C, 3, N, ...] (PyTorch layout); weight: [Cd, C], Cd in {1, C}."""
    assert x.ndim >= 4 and x.shape[2] == 3, "expected [B, C, 3, N, ...]"
    B, C = x.shape[0], x.shape[1]
    trail = x.shape[3:]
    N = int(math.prod(trail))
    Cd, Cin = weight.shape
    assert Cin == C and Cd in (1, C)

    threeC = 3 * C
    dsize = jnp.dtype(x.dtype).itemsize
    mm_dtype = jnp.bfloat16 if x.dtype == jnp.bfloat16 else jnp.float32

    # share_nonlinearity=True (Cd == 1): one shared direction == broadcast row.
    w_eff = (weight if Cd == C else jnp.broadcast_to(weight, (C, C))).astype(jnp.float32)
    w_exp = jnp.kron(w_eff, jnp.eye(3, dtype=jnp.float32)).astype(mm_dtype)       # (3C, 3C)
    r_sum = jnp.kron(jnp.eye(C, dtype=jnp.float32),
                     jnp.ones((1, 3), dtype=jnp.float32))                          # (C, 3C)
    r_bcast = (jnp.kron(jnp.eye(C, dtype=jnp.float32),
                        jnp.ones((3, 1), dtype=jnp.float32))
               * jnp.float32(1.0 - negative_slope))                                # (3C, C)

    # Free, contiguous reshape: [B, C, 3, ...] -> [B, 3C, N]  (row = c*3 + k).
    x2 = x.reshape(B, threeC, N)

    # --- Tile selection against a generation-aware VMEM budget ---------------
    budget = _vmem_budget_bytes()
    const_bytes = 2 * (w_exp.size * w_exp.dtype.itemsize
                       + (r_sum.size + r_bcast.size) * 4)   # counted double-buffered

    def fits(bb_, tn_):
        io = 4 * bb_ * threeC * tn_ * dsize                 # in+out blocks, double-buffered
        tmp = 7 * threeC * tn_ * 4 * min(bb_, 2)            # live f32 intermediates (conservative)
        return io + tmp + const_bytes <= budget

    n_pad128 = pl.cdiv(N, 128) * 128
    tn = _choose_tile_n(n_pad128, fits) if tile_n is None else tile_n
    n_tiles = pl.cdiv(n_pad128, tn)
    n_final = n_tiles * tn
    bb = (_choose_batch_block(B, threeC, tn, dsize, n_tiles, fits)
          if batch_block is None else batch_block)
    assert B % bb == 0, "batch_block must divide the batch size"

    if n_final != N:   # pad lanes so every store stays lane-dense (no vst.msk)
        x2 = jnp.pad(x2, ((0, 0), (0, 0), (0, n_final - N)))

    grid = (B // bb, n_tiles)

    # Advisory cost estimate for XLA scheduling around the custom call.
    cols = B * n_final
    flops = cols * (2 * threeC * threeC + 4 * C * threeC + 2 * threeC * C + 8 * threeC)
    cost = pl.CostEstimate(
        flops=int(flops),
        transcendentals=int(cols * C),
        bytes_accessed=int(2 * B * threeC * n_final * dsize + const_bytes))

    kernel = functools.partial(_vn_leaky_relu_kernel, bb=bb, approx_recip=approx_recip)
    out2 = pl.pallas_call(
        kernel,
        out_shape=jax.ShapeDtypeStruct((B, threeC, n_final), x.dtype),
        grid=grid,
        in_specs=[
            pl.BlockSpec((bb, threeC, tn), lambda b, n: (b, 0, n)),
            pl.BlockSpec((threeC, threeC), lambda b, n: (0, 0)),
            pl.BlockSpec((C, threeC), lambda b, n: (0, 0)),
            pl.BlockSpec((threeC, C), lambda b, n: (0, 0)),
        ],
        out_specs=pl.BlockSpec((bb, threeC, tn), lambda b, n: (b, 0, n)),
        compiler_params=pltpu.CompilerParams(
            dimension_semantics=("parallel", "parallel"),
            vmem_limit_bytes=int(budget),
        ),
        cost_estimate=cost,
    )(x2, w_exp, r_sum, r_bcast)

    if n_final != N:
        out2 = out2[:, :, :N]
    return out2.reshape((B, C, 3) + trail)


def vn_leaky_relu_ref(x, weight, negative_slope=0.2):
    """Pure-JAX reference mirroring the PyTorch forward (Cd in {1, C}, any trailing dims)."""
    d = jnp.einsum("dc,bc...->bd...", weight, x)
    dotprod = jnp.sum(x * d, axis=2, keepdims=True)
    mask = (dotprod >= 0).astype(x.dtype)
    d_norm_sq = jnp.sum(d * d, axis=2, keepdims=True)
    return negative_slope * x + (1.0 - negative_slope) * (
        mask * x + (1.0 - mask) * (x - dotprod / (d_norm_sq + EPS) * d))


if __name__ == "__main__":
    key = jax.random.PRNGKey(0)
    kx, kw, kw1 = jax.random.split(key, 3)

    B, C, N = 2, 8, 256          # x: [B, in_channels, 3, N_samples]
    slope = 0.2
    x = jax.random.normal(kx, (B, C, 3, N), dtype=jnp.float32)
    w = jax.random.normal(kw, (C, C), dtype=jnp.float32) / jnp.sqrt(C)
    ref = vn_leaky_relu_ref(x, w, slope)

    # Default path (approx EUP reciprocal).
    out = jax.block_until_ready(vn_leaky_relu(x, w, slope))
    assert out.shape == x.shape and out.dtype == x.dtype
    assert jnp.allclose(out, ref, atol=2e-2, rtol=2e-2)

    # Exact-reciprocal path matches the PyTorch math tightly.
    out_exact = jax.block_until_ready(vn_leaky_relu(x, w, slope, approx_recip=False))
    assert jnp.allclose(out_exact, ref, atol=1e-5, rtol=1e-5)

    # Explicit lane tiling + batch sub-block (exercises the unrolled-Bb path).
    out_tiled = jax.block_until_ready(
        vn_leaky_relu(x, w, slope, tile_n=128, batch_block=2, approx_recip=False))
    assert jnp.allclose(out_tiled, ref, atol=1e-5, rtol=1e-5)

    # N not a multiple of 128 -> wrapper pads lanes and slices back.
    xr = x[..., :200]
    out_ragged = jax.block_until_ready(vn_leaky_relu(xr, w, slope, approx_recip=False))
    assert jnp.allclose(out_ragged, vn_leaky_relu_ref(xr, w, slope), atol=1e-5, rtol=1e-5)

    # share_nonlinearity=True path: nn.Linear(C, 1, bias=False) -> weight (1, C).
    w1 = jax.random.normal(kw1, (1, C), dtype=jnp.float32) / jnp.sqrt(C)
    out1 = jax.block_until_ready(vn_leaky_relu(x, w1, slope, approx_recip=False))
    assert jnp.allclose(out1, vn_leaky_relu_ref(x, w1, slope), atol=1e-5, rtol=1e-5)

    # bf16 inputs: native-bf16 MXU channel matmul, f32 epilogue.
    xb = x.astype(jnp.bfloat16)
    wb = w.astype(jnp.bfloat16)
    outb = jax.block_until_ready(vn_leaky_relu(xb, wb, slope))
    refb = vn_leaky_relu_ref(xb.astype(jnp.float32), wb.astype(jnp.float32), slope)
    assert outb.dtype == jnp.bfloat16
    assert jnp.allclose(outb.astype(jnp.float32), refb, atol=5e-2, rtol=5e-2)

    # Extra trailing dims ([B, C, 3, N1, N2]) are flattened into the lane axis.
    x5 = x.reshape(B, C, 3, 16, 16)
    out5 = jax.block_until_ready(vn_leaky_relu(x5, w, slope, approx_recip=False))
    assert out5.shape == x5.shape
    assert jnp.allclose(out5, vn_leaky_relu_ref(x5, w, slope), atol=1e-5, rtol=1e-5)

    print("KERNEL_OK")
</pallas_src>

<mosaic_0001>
module attributes {stable_mosaic.version = 11 : i64} {
  func.func @_vn_leaky_relu_kernel(%arg0: i32, %arg1: i32, %arg2: memref<1x24x256xf32, #tpu.memory_space<vmem>>, %arg3: memref<24x24xf32, #tpu.memory_space<vmem>>, %arg4: memref<8x24xf32, #tpu.memory_space<vmem>>, %arg5: memref<24x8xf32, #tpu.memory_space<vmem>>, %arg6: memref<1x24x256xf32, #tpu.memory_space<vmem>>) attributes {dimension_semantics = [#tpu.dimension_semantics<parallel>, #tpu.dimension_semantics<parallel>], iteration_bounds = array<i64: 2, 1>, scalar_prefetch = 0 : i64, scratch_operands = 0 : i64, tpu.core_type = #tpu.core_type<tc>, window_params = [{transform_indices = @transform_0, window_bounds = array<i64: 1, 24, 256>}, {pipeline_mode = #tpu.pipeline_mode<synchronous>, transform_indices = @transform_1, window_bounds = array<i64: 24, 24>}, {pipeline_mode = #tpu.pipeline_mode<synchronous>, transform_indices = @transform_2, window_bounds = array<i64: 8, 24>}, {pipeline_mode = #tpu.pipeline_mode<synchronous>, transform_indices = @transform_3, window_bounds = array<i64: 24, 8>}, {transform_indices = @transform_4, window_bounds = array<i64: 1, 24, 256>}]} {
    %c0 = arith.constant 0 : index
    %c0_0 = arith.constant 0 : index
    %0 = vector.load %arg3[%c0, %c0_0] : memref<24x24xf32, #tpu.memory_space<vmem>>, vector<24x24xf32>
    %c0_1 = arith.constant 0 : index
    %c0_2 = arith.constant 0 : index
    %1 = vector.load %arg4[%c0_1, %c0_2] : memref<8x24xf32, #tpu.memory_space<vmem>>, vector<8x24xf32>
    %c0_3 = arith.constant 0 : index
    %c0_4 = arith.constant 0 : index
    %2 = vector.load %arg5[%c0_3, %c0_4] : memref<24x8xf32, #tpu.memory_space<vmem>>, vector<24x8xf32>
    %c0_5 = arith.constant 0 : index
    %c0_6 = arith.constant 0 : index
    %c0_7 = arith.constant 0 : index
    %3 = vector.load %arg2[%c0_5, %c0_6, %c0_7] : memref<1x24x256xf32, #tpu.memory_space<vmem>>, vector<1x24x256xf32>
    %4 = vector.shape_cast %3 : vector<1x24x256xf32> to vector<24x256xf32>
    %cst = arith.constant dense<0.000000e+00> : vector<24x256xf32>
    %5 = tpu.matmul %0, %4, %cst {dimension_numbers = #tpu.dot_dimension_numbers<[1], [0], [0], [1], [0, 0, 1, 1], [], []>} : vector<24x24xf32>, vector<24x256xf32>, vector<24x256xf32> -> vector<24x256xf32>
    %6 = arith.mulf %4, %5 : vector<24x256xf32>
    %cst_8 = arith.constant dense<0.000000e+00> : vector<8x256xf32>
    %7 = tpu.matmul %1, %6, %cst_8 {dimension_numbers = #tpu.dot_dimension_numbers<[1], [0], [0], [1], [0, 0, 1, 1], [], []>} : vector<8x24xf32>, vector<24x256xf32>, vector<8x256xf32> -> vector<8x256xf32>
    %8 = arith.mulf %5, %5 : vector<24x256xf32>
    %cst_9 = arith.constant dense<0.000000e+00> : vector<8x256xf32>
    %9 = tpu.matmul %1, %8, %cst_9 {dimension_numbers = #tpu.dot_dimension_numbers<[1], [0], [0], [1], [0, 0, 1, 1], [], []>} : vector<8x24xf32>, vector<24x256xf32>, vector<8x256xf32> -> vector<8x256xf32>
    %cst_10 = arith.constant 9.99999996E-13 : f32
    %10 = vector.broadcast %cst_10 : f32 to vector<8x256xf32>
    %11 = arith.addf %9, %10 : vector<8x256xf32>
    %12 = tpu.reciprocal %11 {approx = true} : vector<8x256xf32> -> vector<8x256xf32>
    %cst_11 = arith.constant 0.000000e+00 : f32
    %13 = vector.broadcast %cst_11 : f32 to vector<8x256xf32>
    %14 = arith.cmpf olt, %7, %13 : vector<8x256xf32>
    %15 = arith.mulf %7, %12 : vector<8x256xf32>
    %cst_12 = arith.constant 0.000000e+00 : f32
    %16 = vector.broadcast %cst_12 : f32 to vector<8x256xf32>
    %17 = arith.select %14, %15, %16 : vector<8x256xi1>, vector<8x256xf32>
    %cst_13 = arith.constant dense<0.000000e+00> : vector<24x256xf32>
    %18 = tpu.matmul %2, %17, %cst_13 {dimension_numbers = #tpu.dot_dimension_numbers<[1], [0], [0], [1], [0, 0, 1, 1], [], []>} : vector<24x8xf32>, vector<8x256xf32>, vector<24x256xf32> -> vector<24x256xf32>
    %19 = arith.mulf %18, %5 : vector<24x256xf32>
    %20 = arith.subf %4, %19 : vector<24x256xf32>
    %c0_14 = arith.constant 0 : index
    %c0_15 = arith.constant 0 : index
    %c0_16 = arith.constant 0 : index
    %21 = vector.load %arg6[%c0_14, %c0_15, %c0_16] : memref<1x24x256xf32, #tpu.memory_space<vmem>>, vector<1x24x256xf32>
    %22 = vector.shape_cast %21 : vector<1x24x256xf32> to vector<24x256xf32>
    %23 = vector.shape_cast %20 : vector<24x256xf32> to vector<1x24x256xf32>
    tpu.vector_store %arg6[%c0_14, %c0_15, %c0_16], %23 {strides = array<i32>} : memref<1x24x256xf32, #tpu.memory_space<vmem>>, vector<1x24x256xf32>,
    return
  }
  func.func @transform_0(%arg0: i32, %arg1: i32) -> (i32, i32, i32) {
    %c0_i32 = arith.constant 0 : i32
    %c0_i32_0 = arith.constant 0 : i32
    return %arg0, %c0_i32, %arg1 : i32, i32, i32
  }
  func.func @transform_1(%arg0: i32, %arg1: i32) -> (i32, i32) {
    %c0_i32 = arith.constant 0 : i32
    %c0_i32_0 = arith.constant 0 : i32
    %c0_i32_1 = arith.constant 0 : i32
    return %c0_i32, %c0_i32_0 : i32, i32
  }
  func.func @transform_2(%arg0: i32, %arg1: i32) -> (i32, i32) {
    %c0_i32 = arith.constant 0 : i32
    %c0_i32_0 = arith.constant 0 : i32
    %c0_i32_1 = arith.constant 0 : i32
    return %c0_i32, %c0_i32_0 : i32, i32
  }
  func.func @transform_3(%arg0: i32, %arg1: i32) -> (i32, i32) {
    %c0_i32 = arith.constant 0 : i32
    %c0_i32_0 = arith.constant 0 : i32
    %c0_i32_1 = arith.constant 0 : i32
    return %c0_i32, %c0_i32_0 : i32, i32
  }
  func.func @transform_4(%arg0: i32, %arg1: i32) -> (i32, i32, i32) {
    %c0_i32 = arith.constant 0 : i32
    %c0_i32_0 = arith.constant 0 : i32
    return %arg0, %c0_i32, %arg1 : i32, i32, i32
  }
}

</mosaic_0001>

<llo_original>
// kernel: tpu_custom_call.1
$region0: #{tpu_custom_call.1}
  #allocation0 [shape = 'u32[]', space=smem, size = 0x4, offset = 0x4, fixed_abs, tag = 'smem constant byte address 0x4 - core index']
  #allocation1 [shape = 'u32[144,128]{1,0:T(1,128)}', space=vmem, size = 0x12000, scoped, tag = 'internal scratch']
  %s0 = inlined_call_operand.hbm [shape: f32[2,24,256], index: 0, kind: input, shape index: {}]
  %s1 = inlined_call_operand.vmem [shape: f32[24,24], index: 1, kind: input, shape index: {}]
  %s2 = inlined_call_operand.vmem [shape: f32[8,24], index: 2, kind: input, shape index: {}]
  %s3 = inlined_call_operand.vmem [shape: f32[24,8], index: 3, kind: input, shape index: {}]
  %s4 = inlined_call_operand.hbm [shape: f32[2,24,256], index: 4, kind: output, shape index: {}]
  %s5 = sld [smem:[#allocation0]]
  $region53: #{tpu_custom_call.1} parent=0
    _
  %s7 = ssub.s32 1, %s5
  %s8 = scalar_select 0, %s7, %s5
  $region1: #{tpu_custom_call.1} parent=0
    #allocation2 [shape = 'u8[49152]{0}', space=vmem, size = 0xc000, scoped, tag = 'input window, operand 0']
    #allocation3 [shape = 's32[2]{0}', space=sflag, size = 0x8, scoped, tag = 'scoped memory for tpu_custom_call.1']
    #allocation4 [shape = 's32[2]{0}', space=sflag, size = 0x8, scoped, tag = 'scoped memory for tpu_custom_call.1']
    #allocation5 [shape = 'u8[49152]{0}', space=vmem, size = 0xc000, scoped, tag = 'output window, operand 0']
    %9 = vsyncpa [#allocation3], 0
    %s10 = scalar_lea.sflag [#allocation3], 1
    %11 = vsyncpa %s10, 0
    %12 = vsyncpa [#allocation4], 0
    %s13 = scalar_lea.sflag [#allocation4], 1
    %14 = vsyncpa %s13, 0
    loop: start=0, step=1, limit=4
    $region2: #{tpu_custom_call.1} parent=1 // loop_pre_header
      _
    $region3: #{tpu_custom_call.1} parent=1 // loop_header
      %s16 = sphi 0, %s20
      %p17 = scmp.ge.s32.totalorder %s16, 4
      %s23 = sphi 0, %s35
      %s24 = sphi 0, %s31
      %s25 = sphi 0, %s23
      %s26 = sphi 0, %s24
      %s27 = sphi 0, %s25
      %s28 = sphi 0, %s26
      %s40 = sphi 0, %s42
      %s43 = sphi 0, %s40
      %s44 = sphi 0, %s43
      %s60 = sphi 0, %s44
      %s64 = sphi 0, %s64
      %s66 = sphi 0, %s64
      %s67 = sphi 0, %s66
      %s81 = sphi 0, %s67
      %s85 = sphi 0, %s85
      %s87 = sphi 0, %s85
      %s88 = sphi 0, %s87
      %s102 = sphi 0, %s88
      %s106 = sphi 0, %s106
      %s108 = sphi 0, %s106
      %s109 = sphi 0, %s108
      %s123 = sphi 0, %s109
      %s131 = sphi 0, %s133
      %s134 = sphi 0, %s131
      %s135 = sphi 0, %s134
      %s151 = sphi 0, %s135
    $region4: #{tpu_custom_call.1} parent=1 // loop_header_branch
      %19 = sbr.rel (%p17) target = $region8
    $region5: #{tpu_custom_call.1} parent=1 // loop_body
      %s21 = ssub.s32 %s16, 1
      %s22 = ssub.s32 %s16, 2
      %s29 = sadd.s32 1, %s24
      %p30 = scmp.ge.s32.totalorder %s29, 1
      %s31 = scalar_select %p30, 0, %s29
      %s32 = sadd.s32 1, %s23
      %s33 = scalar_select %p30, %s32, %s23
      %p34 = scmp.ge.s32.totalorder %s33, 2
      %s35 = scalar_select %p34, 0, %s33
      %s36 = ssub.s32 %s23, %s35
      %s37 = ssub.s32 %s24, %s31
      %s38 = sor.u32 %s36, %s37
      %p39 = scmp.eq.s32.totalorder %s38, 0
      %s41 = sadd.s32 %s40, 1
      %s42 = scalar_select %p39, %s40, %s41
      %p45 = pneg %p39
      %p46 = scmp.eq.s32.totalorder %s16, 1
      %p47 = por %p45, %p46
      %p48 = scmp.ne.s32.totalorder %s40, %s43
      %p49 = scmp.eq.s32.totalorder %s16, 0
      %p50 = por %p48, %p49
      %p51 = scmp.ne.s32.totalorder %s40, %s43
      %p52 = scmp.eq.s32.totalorder %s21, 1
      %p53 = por %p51, %p52
      %p54 = scmp.ne.s32.totalorder %s43, %s44
      %p55 = scmp.eq.s32.totalorder %s21, 0
      %p56 = por %p54, %p55
      %p57 = scmp.ne.s32.totalorder %s43, %s44
      %p58 = scmp.eq.s32.totalorder %s22, 1
      %p59 = por %p57, %p58
      %p61 = scmp.ne.s32.totalorder %s44, %s60
      %p62 = scmp.eq.s32.totalorder %s22, 0
      %p63 = por %p61, %p62
      %s65 = sadd.s32 %s64, 1
      %p68 = scmp.eq.s32.totalorder %s16, 1
      %p69 = scmp.ne.s32.totalorder %s64, %s66
      %p70 = scmp.eq.s32.totalorder %s16, 0
      %p71 = por %p69, %p70
      %p72 = scmp.ne.s32.totalorder %s64, %s66
      %p73 = scmp.eq.s32.totalorder %s21, 1
      %p74 = por %p72, %p73
      %p75 = scmp.ne.s32.totalorder %s66, %s67
      %p76 = scmp.eq.s32.totalorder %s21, 0
      %p77 = por %p75, %p76
      %p78 = scmp.ne.s32.totalorder %s66, %s67
      %p79 = scmp.eq.s32.totalorder %s22, 1
      %p80 = por %p78, %p79
      %p82 = scmp.ne.s32.totalorder %s67, %s81
      %p83 = scmp.eq.s32.totalorder %s22, 0
      %p84 = por %p82, %p83
      %s86 = sadd.s32 %s85, 1
      %p89 = scmp.eq.s32.totalorder %s16, 1
      %p90 = scmp.ne.s32.totalorder %s85, %s87
      %p91 = scmp.eq.s32.totalorder %s16, 0
      %p92 = por %p90, %p91
      %p93 = scmp.ne.s32.totalorder %s85, %s87
      %p94 = scmp.eq.s32.totalorder %s21, 1
      %p95 = por %p93, %p94
      %p96 = scmp.ne.s32.totalorder %s87, %s88
      %p97 = scmp.eq.s32.totalorder %s21, 0
      %p98 = por %p96, %p97
      %p99 = scmp.ne.s32.totalorder %s87, %s88
      %p100 = scmp.eq.s32.totalorder %s22, 1
      %p101 = por %p99, %p100
      %p103 = scmp.ne.s32.totalorder %s88, %s102
      %p104 = scmp.eq.s32.totalorder %s22, 0
      %p105 = por %p103, %p104
      %s107 = sadd.s32 %s106, 1
      %p110 = scmp.eq.s32.totalorder %s16, 1
      %p111 = scmp.ne.s32.totalorder %s106, %s108
      %p112 = scmp.eq.s32.totalorder %s16, 0
      %p113 = por %p111, %p112
      %p114 = scmp.ne.s32.totalorder %s106, %s108
      %p115 = scmp.eq.s32.totalorder %s21, 1
      %p116 = por %p114, %p115
      %p117 = scmp.ne.s32.totalorder %s108, %s109
      %p118 = scmp.eq.s32.totalorder %s21, 0
      %p119 = por %p117, %p118
      %p120 = scmp.ne.s32.totalorder %s108, %s109
      %p121 = scmp.eq.s32.totalorder %s22, 1
      %p122 = por %p120, %p121
      %p124 = scmp.ne.s32.totalorder %s109, %s123
      %p125 = scmp.eq.s32.totalorder %s22, 0
      %p126 = por %p124, %p125
      %s127 = ssub.s32 %s23, %s35
      %s128 = ssub.s32 %s24, %s31
      %s129 = sor.u32 %s127, %s128
      %p130 = scmp.eq.s32.totalorder %s129, 0
      %s132 = sadd.s32 %s131, 1
      %s133 = scalar_select %p130, %s131, %s132
      %p136 = pneg %p130
      %p137 = scmp.eq.s32.totalorder %s16, 1
      %p138 = por %p136, %p137
      %p139 = scmp.ne.s32.totalorder %s131, %s134
      %p140 = scmp.eq.s32.totalorder %s16, 0
      %p141 = por %p139, %p140
      %p142 = scmp.ne.s32.totalorder %s131, %s134
      %p143 = scmp.eq.s32.totalorder %s21, 1
      %p144 = por %p142, %p143
      %p145 = scmp.ne.s32.totalorder %s134, %s135
      %p146 = scmp.eq.s32.totalorder %s21, 0
      %p147 = por %p145, %p146
      %p148 = scmp.ne.s32.totalorder %s134, %s135
      %p149 = scmp.eq.s32.totalorder %s22, 1
      %p150 = por %p148, %p149
      %p152 = scmp.ne.s32.totalorder %s135, %s151
      %p153 = scmp.eq.s32.totalorder %s22, 0
      %p154 = por %p152, %p153
      %p155 = scmp.le.s32.totalorder 1, %s16
      %p156 = scmp.lt.s32.totalorder %s16, 3
      %p157 = pnand %p155, %p156
      %p158 = pneg %p157
      // Predicated region
      $region9: #{tpu_custom_call.1} parent=5 // pred_check
        _
      $region10: #{tpu_custom_call.1} parent=5 // pred_check_branch
        %160 = sbr.rel (%p157) target = $region12
      $region11: #{tpu_custom_call.1} parent=5 // pred_region
        %s161 = ssub.s32 %s16, 1
        // Predicated region
        $region13: #{tpu_custom_call.1} parent=11 // pred_check
          %p162 = pneg %p77
        $region14: #{tpu_custom_call.1} parent=11 // pred_check_branch
          %164 = sbr.rel (%p162) target = $region16
        $region15: #{tpu_custom_call.1} parent=11 // pred_region
          _
        $region16: #{tpu_custom_call.1} parent=11 // pred_fallthru
          _
        // Predicated region
        $region17: #{tpu_custom_call.1} parent=11 // pred_check
          %p165 = pneg %p98
        $region18: #{tpu_custom_call.1} parent=11 // pred_check_branch
          %167 = sbr.rel (%p165) target = $region20
        $region19: #{tpu_custom_call.1} parent=11 // pred_region
          _
        $region20: #{tpu_custom_call.1} parent=11 // pred_fallthru
          _
        // Predicated region
        $region21: #{tpu_custom_call.1} parent=11 // pred_check
          %p168 = pneg %p119
        $region22: #{tpu_custom_call.1} parent=11 // pred_check_branch
          %170 = sbr.rel (%p168) target = $region24
        $region23: #{tpu_custom_call.1} parent=11 // pred_region
          _
        $region24: #{tpu_custom_call.1} parent=11 // pred_fallthru
          _
      $region12: #{tpu_custom_call.1} parent=5 // pred_fallthru
        _
      %p171 = scmp.lt.s32.totalorder %s16, 2
      // Predicated region
      $region25: #{tpu_custom_call.1} parent=5 // pred_check
        %p172 = pneg %p171
      $region26: #{tpu_custom_call.1} parent=5 // pred_check_branch
        %174 = sbr.rel (%p172) target = $region28
      $region27: #{tpu_custom_call.1} parent=5 // pred_region
        // Predicated region
        $region29: #{tpu_custom_call.1} parent=27 // pred_check
          %p175 = pneg %p50
        $region30: #{tpu_custom_call.1} parent=27 // pred_check_branch
          %177 = sbr.rel (%p175) target = $region32
        $region31: #{tpu_custom_call.1} parent=27 // pred_region
          %s178 = sand.u32 %s40, 1
          %s179 = scalar_lea.sflag [#allocation3], %s178
          %s180 = sand.u32 %s40, 1
          %s181 = smul.addr %s180, 48
          %s182 = scalar_lea.vmem [#allocation2], %s181
          %s183 = smul.u32 2, %s24
          %s185 = ssub.s32 768, 768
          %186 = vsyncadd %s179, %s185
          %s187 = smul.addr %s23, 6
          %s188 = sadd.s32 %s183, %s187
          %s189 = smul.addr %s188, 128
          %s190 = scalar_lea.hbm %s0, %s189
          %s191 = sshll.u32 %s182, 4
          %s192 = int_to_ptr.vmem [resolvable:$true] %s191
          %197 = dma.hbm_to_vmem [thread:$0]  %s190, 768, %s192, %s179, 256, 256, 16
        $region32: #{tpu_custom_call.1} parent=27 // pred_fallthru
          _
      $region28: #{tpu_custom_call.1} parent=5 // pred_fallthru
        _
      %p198 = scmp.le.s32.totalorder 1, %s16
      %p199 = scmp.lt.s32.totalorder %s16, 3
      %p200 = pnand %p198, %p199
      %p201 = pneg %p200
      // Predicated region
      $region33: #{tpu_custom_call.1} parent=5 // pred_check
        _
      $region34: #{tpu_custom_call.1} parent=5 // pred_check_branch
        %203 = sbr.rel (%p200) target = $region36
      $region35: #{tpu_custom_call.1} parent=5 // pred_region
        %s204 = ssub.s32 %s16, 1
        %s205 = sand.u32 %s43, 1
        %s206 = scalar_lea.sflag [#allocation3], %s205
        %s207 = sand.u32 %s43, 1
        %s208 = smul.addr %s207, 48
        %s209 = scalar_lea.vmem [#allocation2], %s208
        // Predicated region
        $region37: #{tpu_custom_call.1} parent=35 // pred_check
          %p210 = pneg %p56
        $region38: #{tpu_custom_call.1} parent=35 // pred_check_branch
          %212 = sbr.rel (%p210) target = $region40
        $region39: #{tpu_custom_call.1} parent=35 // pred_region
          %213 = dma.done %s206, 768
        $region40: #{tpu_custom_call.1} parent=35 // pred_fallthru
          _
        %s214 = sand.u32 %s43, 1
        %s215 = scalar_lea.sflag [#allocation3], %s214
        %s216 = sand.u32 %s43, 1
        %s217 = smul.addr %s216, 48
        %s218 = scalar_lea.vmem [#allocation2], %s217
        %p219 = pneg %p56
        %p220 = pneg %p53
        %p221 = pneg %p77
        %p222 = pneg %p74
        %p223 = pneg %p98
        %p224 = pneg %p95
        %p225 = pneg %p119
        %p226 = pneg %p116
        %p227 = pneg %p147
        %p228 = pneg %p144
        %s229 = sand.u32 %s134, 1
        %s230 = scalar_lea.sflag [#allocation4], %s229
        %s231 = sand.u32 %s134, 1
        %s232 = smul.addr %s231, 48
        %s233 = scalar_lea.vmem [#allocation5], %s232
        %s234 = smul.u32 2, %s26
        %s235 = smul.u32 2, %s26
        %v236 = vld [vmem:[%s1] sm:$0xff]
        %v237 = vld [vmem:[%s1 + $0x8] sm:$0xff]
        %v238 = vld [vmem:[%s1 + $0x10] sm:$0xff]
        %v239 = vld [vmem:[%s2] sm:$0xff]
        %v240 = vld [vmem:[%s3] sm:$0xff]
        %v241 = vld [vmem:[%s3 + $0x8] sm:$0xff]
        %v242 = vld [vmem:[%s3 + $0x10] sm:$0xff]
        %v243 = vld [vmem:[%s209] sm:$0xff]
        %v244 = vld [vmem:[%s209 + $0x8] sm:$0xff]
        %v245 = vld [vmem:[%s209 + $0x10] sm:$0xff]
        %v246 = vld [vmem:[%s209 + $0x18] sm:$0xff]
        %v247 = vld [vmem:[%s209 + $0x20] sm:$0xff]
        %v248 = vld [vmem:[%s209 + $0x28] sm:$0xff]
        %vm249 = vcmask 195584
        %v251 = vsel %vm249, %v236, 0
        %v254 = vsel %vm249, %v237, 0
        %v257 = vsel %vm249, %v238, 0
        %259 = vmatprep.subr.mxu0 %v244
        %260 = vmatpush1.msra.mxu0 %v243
        %261 = vmatprep.subr.mxu0 %v246
        %262 = vmatpush1.msra.mxu0 %v245
        %263 = vmatprep.subr.mxu0 %v248
        %264 = vmatpush1.msra.mxu0 %v247
        %265 = vmatprep.subr.mxu0 0.0
        %266 = vmatpush1.msra.mxu0 0.0
        %267 = vmatprep.subr.mxu0 0.0
        %268 = vmatpush1.msra.mxu0 0.0
        %269 = vmatprep.subr.mxu0 0.0
        %270 = vmatpush1.msra.mxu0 0.0
        %271 = vmatprep.subr.mxu0 0.0
        %272 = vmatpush1.msra.mxu0 0.0
        %273 = vmatprep.subr.mxu0 0.0
        %274 = vmatpush1.msra.mxu0 0.0
        %275 = vmatprep.subr.mxu0 0.0
        %276 = vmatpush1.msra.mxu0 0.0
        %277 = vmatprep.subr.mxu0 0.0
        %278 = vmatpush1.msra.mxu0 0.0
        %279 = vmatprep.subr.mxu0 0.0
        %280 = vmatpush1.msra.mxu0 0.0
        %281 = vmatprep.subr.mxu0 0.0
        %282 = vmatpush1.msra.mxu0 0.0
        %283 = vmatprep.subr.mxu0 0.0
        %284 = vmatpush1.msra.mxu0 0.0
        %285 = vmatprep.subr.mxu0 0.0
        %286 = vmatpush1.msra.mxu0 0.0
        %287 = vmatprep.subr.mxu0 0.0
        %288 = vmatpush1.msra.mxu0 0.0
        %289 = vmatprep.subr.mxu0 0.0
        %290 = vmatpush1.msra.mxu0 0.0
        %291 = vmatprep.subr.mxu0 0.0
        %292 = vmatpush1.msra.mxu0 0.0
        %293 = vmatprep.subr.mxu0 0.0
        %294 = vmatpush1.msra.mxu0 0.0
        %295 = vmatprep.subr.mxu0 0.0
        %296 = vmatpush1.msra.mxu0 0.0
        %297 = vmatprep.subr.mxu0 0.0
        %298 = vmatpush1.msra.mxu0 0.0
        %299 = vmatprep.subr.mxu0 0.0
        %300 = vmatpush1.msra.mxu0 0.0
        %301 = vmatprep.subr.mxu0 0.0
        %302 = vmatpush1.msra.mxu0 0.0
        %303 = vmatprep.subr.mxu0 0.0
        %304 = vmatpush1.msra.mxu0 0.0
        %305 = vmatprep.subr.mxu0 0.0
        %306 = vmatpush1.msra.mxu0 0.0
        %307 = vmatprep.subr.mxu0 0.0
        %308 = vmatpush1.msra.mxu0 0.0
        %309 = vmatprep.subr.mxu0 0.0
        %310 = vmatpush1.msra.mxu0 0.0
        %311 = vmatprep.subr.mxu0 0.0
        %312 = vmatpush1.msra.mxu0 0.0
        %313 = vmatprep.subr.mxu0 0.0
        %314 = vmatpush1.msra.mxu0 0.0
        %315 = vmatprep.subr.mxu0 0.0
        %316 = vmatpush1.msra.mxu0 0.0
        %317 = vmatprep.subr.mxu0 0.0
        %318 = vmatpush1.msra.mxu0 0.0
        %319 = vmatprep.subr.mxu0 0.0
        %320 = vmatpush1.msra.mxu0 0.0
        %321 = vmatprep.subr.mxu0 0.0
        %322 = vmatpush1.msra.mxu0 0.0
        %323 = vmatprep.mubr.f32.mxu0 0.0
        %324 = vmatmul.mubr.f32.gmra.mrb[0].mxu0 %v251
        %v325 = vpop.f32.mrb[0].mxu0
        %v326 = vadd.f32 0.0, %v325
        %v327 = vpop.f32.mrb[0].mxu0
        %v328 = vadd.f32 0.0, %v327
        %329 = vmatprep.mubr.f32.mxu0 0.0
        %330 = vmatmul.mubr.f32.gmra.mrb[0].mxu0 %v254
        %v331 = vpop.f32.mrb[0].mxu0
        %v332 = vadd.f32 0.0, %v331
        %v333 = vpop.f32.mrb[0].mxu0
        %v334 = vadd.f32 0.0, %v333
        %335 = vmatprep.mubr.f32.mxu0 0.0
        %336 = vmatmul.mubr.f32.gmra.mrb[0].mxu0 %v257
        %v337 = vpop.f32.mrb[0].mxu0
        %v338 = vadd.f32 0.0, %v337
        %v339 = vpop.f32.mrb[0].mxu0
        %v340 = vadd.f32 0.0, %v339
        %341 = vdwg.mxu0
        %v342 = vmul.f32 %v243, %v326
        %v343 = vmul.f32 %v244, %v328
        %v344 = vmul.f32 %v245, %v332
        %v345 = vmul.f32 %v246, %v334
        %v346 = vmul.f32 %v247, %v338
        %v347 = vmul.f32 %v248, %v340
        %v349 = vsel %vm249, %v239, 0
        %351 = vmatprep.subr.mxu0 %v343
        %352 = vmatpush1.msra.mxu0 %v342
        %353 = vmatprep.subr.mxu0 %v345
        %354 = vmatpush1.msra.mxu0 %v344
        %355 = vmatprep.subr.mxu0 %v347
        %356 = vmatpush1.msra.mxu0 %v346
        %357 = vmatprep.subr.mxu0 0.0
        %358 = vmatpush1.msra.mxu0 0.0
        %359 = vmatprep.subr.mxu0 0.0
        %360 = vmatpush1.msra.mxu0 0.0
        %361 = vmatprep.subr.mxu0 0.0
        %362 = vmatpush1.msra.mxu0 0.0
        %363 = vmatprep.subr.mxu0 0.0
        %364 = vmatpush1.msra.mxu0 0.0
        %365 = vmatprep.subr.mxu0 0.0
        %366 = vmatpush1.msra.mxu0 0.0
        %367 = vmatprep.subr.mxu0 0.0
        %368 = vmatpush1.msra.mxu0 0.0
        %369 = vmatprep.subr.mxu0 0.0
        %370 = vmatpush1.msra.mxu0 0.0
        %371 = vmatprep.subr.mxu0 0.0
        %372 = vmatpush1.msra.mxu0 0.0
        %373 = vmatprep.subr.mxu0 0.0
        %374 = vmatpush1.msra.mxu0 0.0
        %375 = vmatprep.subr.mxu0 0.0
        %376 = vmatpush1.msra.mxu0 0.0
        %377 = vmatprep.subr.mxu0 0.0
        %378 = vmatpush1.msra.mxu0 0.0
        %379 = vmatprep.subr.mxu0 0.0
        %380 = vmatpush1.msra.mxu0 0.0
        %381 = vmatprep.subr.mxu0 0.0
        %382 = vmatpush1.msra.mxu0 0.0
        %383 = vmatprep.subr.mxu0 0.0
        %384 = vmatpush1.msra.mxu0 0.0
        %385 = vmatprep.subr.mxu0 0.0
        %386 = vmatpush1.msra.mxu0 0.0
        %387 = vmatprep.subr.mxu0 0.0
        %388 = vmatpush1.msra.mxu0 0.0
        %389 = vmatprep.subr.mxu0 0.0
        %390 = vmatpush1.msra.mxu0 0.0
        %391 = vmatprep.subr.mxu0 0.0
        %392 = vmatpush1.msra.mxu0 0.0
        %393 = vmatprep.subr.mxu0 0.0
        %394 = vmatpush1.msra.mxu0 0.0
        %395 = vmatprep.subr.mxu0 0.0
        %396 = vmatpush1.msra.mxu0 0.0
        %397 = vmatprep.subr.mxu0 0.0
        %398 = vmatpush1.msra.mxu0 0.0
        %399 = vmatprep.subr.mxu0 0.0
        %400 = vmatpush1.msra.mxu0 0.0
        %401 = vmatprep.subr.mxu0 0.0
        %402 = vmatpush1.msra.mxu0 0.0
        %403 = vmatprep.subr.mxu0 0.0
        %404 = vmatpush1.msra.mxu0 0.0
        %405 = vmatprep.subr.mxu0 0.0
        %406 = vmatpush1.msra.mxu0 0.0
        %407 = vmatprep.subr.mxu0 0.0
        %408 = vmatpush1.msra.mxu0 0.0
        %409 = vmatprep.subr.mxu0 0.0
        %410 = vmatpush1.msra.mxu0 0.0
        %411 = vmatprep.subr.mxu0 0.0
        %412 = vmatpush1.msra.mxu0 0.0
        %413 = vmatprep.subr.mxu0 0.0
        %414 = vmatpush1.msra.mxu0 0.0
        %415 = vmatprep.mubr.f32.mxu0 0.0
        %416 = vmatmul.mubr.f32.gmra.mrb[0].mxu0 %v349
        %v417 = vpop.f32.mrb[0].mxu0
        %v418 = vadd.f32 0.0, %v417
        %v419 = vpop.f32.mrb[0].mxu0
        %v420 = vadd.f32 0.0, %v419
        %421 = vdwg.mxu0
        %v422 = vmul.f32 %v326, %v326
        %v423 = vmul.f32 %v328, %v328
        %v424 = vmul.f32 %v332, %v332
        %v425 = vmul.f32 %v334, %v334
        %v426 = vmul.f32 %v338, %v338
        %v427 = vmul.f32 %v340, %v340
        %428 = vmatprep.subr.mxu0 %v423
        %429 = vmatpush1.msra.mxu0 %v422
        %430 = vmatprep.subr.mxu0 %v425
        %431 = vmatpush1.msra.mxu0 %v424
        %432 = vmatprep.subr.mxu0 %v427
        %433 = vmatpush1.msra.mxu0 %v426
        %434 = vmatprep.subr.mxu0 0.0
        %435 = vmatpush1.msra.mxu0 0.0
        %436 = vmatprep.subr.mxu0 0.0
        %437 = vmatpush1.msra.mxu0 0.0
        %438 = vmatprep.subr.mxu0 0.0
        %439 = vmatpush1.msra.mxu0 0.0
        %440 = vmatprep.subr.mxu0 0.0
        %441 = vmatpush1.msra.mxu0 0.0
        %442 = vmatprep.subr.mxu0 0.0
        %443 = vmatpush1.msra.mxu0 0.0
        %444 = vmatprep.subr.mxu0 0.0
        %445 = vmatpush1.msra.mxu0 0.0
        %446 = vmatprep.subr.mxu0 0.0
        %447 = vmatpush1.msra.mxu0 0.0
        %448 = vmatprep.subr.mxu0 0.0
        %449 = vmatpush1.msra.mxu0 0.0
        %450 = vmatprep.subr.mxu0 0.0
        %451 = vmatpush1.msra.mxu0 0.0
        %452 = vmatprep.subr.mxu0 0.0
        %453 = vmatpush1.msra.mxu0 0.0
        %454 = vmatprep.subr.mxu0 0.0
        %455 = vmatpush1.msra.mxu0 0.0
        %456 = vmatprep.subr.mxu0 0.0
        %457 = vmatpush1.msra.mxu0 0.0
        %458 = vmatprep.subr.mxu0 0.0
        %459 = vmatpush1.msra.mxu0 0.0
        %460 = vmatprep.subr.mxu0 0.0
        %461 = vmatpush1.msra.mxu0 0.0
        %462 = vmatprep.subr.mxu0 0.0
        %463 = vmatpush1.msra.mxu0 0.0
        %464 = vmatprep.subr.mxu0 0.0
        %465 = vmatpush1.msra.mxu0 0.0
        %466 = vmatprep.subr.mxu0 0.0
        %467 = vmatpush1.msra.mxu0 0.0
        %468 = vmatprep.subr.mxu0 0.0
        %469 = vmatpush1.msra.mxu0 0.0
        %470 = vmatprep.subr.mxu0 0.0
        %471 = vmatpush1.msra.mxu0 0.0
        %472 = vmatprep.subr.mxu0 0.0
        %473 = vmatpush1.msra.mxu0 0.0
        %474 = vmatprep.subr.mxu0 0.0
        %475 = vmatpush1.msra.mxu0 0.0
        %476 = vmatprep.subr.mxu0 0.0
        %477 = vmatpush1.msra.mxu0 0.0
        %478 = vmatprep.subr.mxu0 0.0
        %479 = vmatpush1.msra.mxu0 0.0
        %480 = vmatprep.subr.mxu0 0.0
        %481 = vmatpush1.msra.mxu0 0.0
        %482 = vmatprep.subr.mxu0 0.0
        %483 = vmatpush1.msra.mxu0 0.0
        %484 = vmatprep.subr.mxu0 0.0
        %485 = vmatpush1.msra.mxu0 0.0
        %486 = vmatprep.subr.mxu0 0.0
        %487 = vmatpush1.msra.mxu0 0.0
        %488 = vmatprep.subr.mxu0 0.0
        %489 = vmatpush1.msra.mxu0 0.0
        %490 = vmatprep.subr.mxu0 0.0
        %491 = vmatpush1.msra.mxu0 0.0
        %492 = vmatprep.mubr.f32.mxu0 0.0
        %493 = vmatmul.mubr.f32.gmra.mrb[0].mxu0 %v349
        %v494 = vpop.f32.mrb[0].mxu0
        %v495 = vadd.f32 1e-12, %v494
        %v496 = vpop.f32.mrb[0].mxu0
        %v497 = vadd.f32 1e-12, %v496
        %498 = vdwg.mxu0
        %v499 = vrcp.pop %v495
        %v500 = vrcp.pop %v497
        %vm501 = vcmp.lt.f32.partialorder %v418, 0.0
        %vm502 = vcmp.lt.f32.partialorder %v420, 0.0
        %v503 = vmul.f32 %v418, %v499
        %v504 = vmul.f32 %v420, %v500
        %v505 = vsel %vm501, %v503, 0.0
        %v506 = vsel %vm502, %v504, 0.0
        %vm507 = vcmask 64512
        %v509 = vsel %vm507, %v240, 0
        %v512 = vsel %vm507, %v241, 0
        %v515 = vsel %vm507, %v242, 0
        %517 = vmatprep.subr.mxu0 %v506
        %518 = vmatpush1.msra.mxu0 %v505
        %519 = vmatprep.subr.mxu0 0.0
        %520 = vmatpush1.msra.mxu0 0.0
        %521 = vmatprep.subr.mxu0 0.0
        %522 = vmatpush1.msra.mxu0 0.0
        %523 = vmatprep.subr.mxu0 0.0
        %524 = vmatpush1.msra.mxu0 0.0
        %525 = vmatprep.subr.mxu0 0.0
        %526 = vmatpush1.msra.mxu0 0.0
        %527 = vmatprep.subr.mxu0 0.0
        %528 = vmatpush1.msra.mxu0 0.0
        %529 = vmatprep.subr.mxu0 0.0
        %530 = vmatpush1.msra.mxu0 0.0
        %531 = vmatprep.subr.mxu0 0.0
        %532 = vmatpush1.msra.mxu0 0.0
        %533 = vmatprep.subr.mxu0 0.0
        %534 = vmatpush1.msra.mxu0 0.0
        %535 = vmatprep.subr.mxu0 0.0
        %536 = vmatpush1.msra.mxu0 0.0
        %537 = vmatprep.subr.mxu0 0.0
        %538 = vmatpush1.msra.mxu0 0.0
        %539 = vmatprep.subr.mxu0 0.0
        %540 = vmatpush1.msra.mxu0 0.0
        %541 = vmatprep.subr.mxu0 0.0
        %542 = vmatpush1.msra.mxu0 0.0
        %543 = vmatprep.subr.mxu0 0.0
        %544 = vmatpush1.msra.mxu0 0.0
        %545 = vmatprep.subr.mxu0 0.0
        %546 = vmatpush1.msra.mxu0 0.0
        %547 = vmatprep.subr.mxu0 0.0
        %548 = vmatpush1.msra.mxu0 0.0
        %549 = vmatprep.subr.mxu0 0.0
        %550 = vmatpush1.msra.mxu0 0.0
        %551 = vmatprep.subr.mxu0 0.0
        %552 = vmatpush1.msra.mxu0 0.0
        %553 = vmatprep.subr.mxu0 0.0
        %554 = vmatpush1.msra.mxu0 0.0
        %555 = vmatprep.subr.mxu0 0.0
        %556 = vmatpush1.msra.mxu0 0.0
        %557 = vmatprep.subr.mxu0 0.0
        %558 = vmatpush1.msra.mxu0 0.0
        %559 = vmatprep.subr.mxu0 0.0
        %560 = vmatpush1.msra.mxu0 0.0
        %561 = vmatprep.subr.mxu0 0.0
        %562 = vmatpush1.msra.mxu0 0.0
        %563 = vmatprep.subr.mxu0 0.0
        %564 = vmatpush1.msra.mxu0 0.0
        %565 = vmatprep.subr.mxu0 0.0
        %566 = vmatpush1.msra.mxu0 0.0
        %567 = vmatprep.subr.mxu0 0.0
        %568 = vmatpush1.msra.mxu0 0.0
        %569 = vmatprep.subr.mxu0 0.0
        %570 = vmatpush1.msra.mxu0 0.0
        %571 = vmatprep.subr.mxu0 0.0
        %572 = vmatpush1.msra.mxu0 0.0
        %573 = vmatprep.subr.mxu0 0.0
        %574 = vmatpush1.msra.mxu0 0.0
        %575 = vmatprep.subr.mxu0 0.0
        %576 = vmatpush1.msra.mxu0 0.0
        %577 = vmatprep.subr.mxu0 0.0
        %578 = vmatpush1.msra.mxu0 0.0
        %579 = vmatprep.subr.mxu0 0.0
        %580 = vmatpush1.msra.mxu0 0.0
        %581 = vmatprep.mubr.f32.mxu0 0.0
        %582 = vmatmul.mubr.f32.gmra.mrb[0].mxu0 %v509
        %v583 = vpop.f32.mrb[0].mxu0
        %v584 = vadd.f32 0.0, %v583
        %v585 = vpop.f32.mrb[0].mxu0
        %v586 = vadd.f32 0.0, %v585
        %587 = vmatprep.mubr.f32.mxu0 0.0
        %588 = vmatmul.mubr.f32.gmra.mrb[0].mxu0 %v512
        %v589 = vpop.f32.mrb[0].mxu0
        %v590 = vadd.f32 0.0, %v589
        %v591 = vpop.f32.mrb[0].mxu0
        %v592 = vadd.f32 0.0, %v591
        %593 = vmatprep.mubr.f32.mxu0 0.0
        %594 = vmatmul.mubr.f32.gmra.mrb[0].mxu0 %v515
        %v595 = vpop.f32.mrb[0].mxu0
        %v596 = vadd.f32 0.0, %v595
        %v597 = vpop.f32.mrb[0].mxu0
        %v598 = vadd.f32 0.0, %v597
        %599 = vdwg.mxu0
        %v600 = vmul.f32 %v584, %v326
        %v601 = vmul.f32 %v586, %v328
        %v602 = vmul.f32 %v590, %v332
        %v603 = vmul.f32 %v592, %v334
        %v604 = vmul.f32 %v596, %v338
        %v605 = vmul.f32 %v598, %v340
        %v606 = vsub.f32 %v243, %v600
        %v607 = vsub.f32 %v244, %v601
        %v608 = vsub.f32 %v245, %v602
        %v609 = vsub.f32 %v246, %v603
        %v610 = vsub.f32 %v247, %v604
        %v611 = vsub.f32 %v248, %v605
        %612 = vst [vmem:[%s233] sm:$0xff] %v606
        %613 = vst [vmem:[%s233 + $0x8] sm:$0xff] %v607
        %614 = vst [vmem:[%s233 + $0x10] sm:$0xff] %v608
        %615 = vst [vmem:[%s233 + $0x18] sm:$0xff] %v609
        %616 = vst [vmem:[%s233 + $0x20] sm:$0xff] %v610
        %617 = vst [vmem:[%s233 + $0x28] sm:$0xff] %v611
        %s618 = sand.u32 %s134, 1
        %s619 = scalar_lea.sflag [#allocation4], %s618
        %s620 = sand.u32 %s134, 1
        %s621 = smul.addr %s620, 48
        %s622 = scalar_lea.vmem [#allocation5], %s621
        // Predicated region
        $region41: #{tpu_custom_call.1} parent=35 // pred_check
          %p623 = pneg %p144
        $region42: #{tpu_custom_call.1} parent=35 // pred_check_branch
          %625 = sbr.rel (%p623) target = $region44
        $region43: #{tpu_custom_call.1} parent=35 // pred_region
          %s626 = smul.u32 2, %s26
          %s628 = ssub.s32 768, 768
          %629 = vsyncadd %s619, %s628
          %s630 = smul.addr %s25, 6
          %s631 = sadd.s32 %s626, %s630
          %s632 = smul.addr %s631, 128
          %s633 = scalar_lea.hbm %s4, %s632
          %s634 = sshll.u32 %s622, 4
          %s635 = int_to_ptr.vmem [resolvable:$true] %s634
          %640 = dma.vmem_to_hbm [thread:$0]  %s635, 768, %s633, %s619, 256, 256, 16
        $region44: #{tpu_custom_call.1} parent=35 // pred_fallthru
          _
      $region36: #{tpu_custom_call.1} parent=5 // pred_fallthru
        _
      %p641 = scmp.le.s32.totalorder 2, %s16
      // Predicated region
      $region45: #{tpu_custom_call.1} parent=5 // pred_check
        %p642 = pneg %p641
      $region46: #{tpu_custom_call.1} parent=5 // pred_check_branch
        %644 = sbr.rel (%p642) target = $region48
      $region47: #{tpu_custom_call.1} parent=5 // pred_region
        %s645 = ssub.s32 %s16, 2
        // Predicated region
        $region49: #{tpu_custom_call.1} parent=47 // pred_check
          %p646 = pneg %p150
        $region50: #{tpu_custom_call.1} parent=47 // pred_check_branch
          %648 = sbr.rel (%p646) target = $region52
        $region51: #{tpu_custom_call.1} parent=47 // pred_region
          %s649 = sand.u32 %s135, 1
          %s650 = scalar_lea.sflag [#allocation4], %s649
          %s651 = sand.u32 %s135, 1
          %s652 = smul.addr %s651, 48
          %s653 = scalar_lea.vmem [#allocation5], %s652
          %654 = dma.done %s650, 768
        $region52: #{tpu_custom_call.1} parent=47 // pred_fallthru
          _
      $region48: #{tpu_custom_call.1} parent=5 // pred_fallthru
        _
    $region6: #{tpu_custom_call.1} parent=1 // loop_footer
      %s20 = sadd.s32 1, %s16
    $region7: #{tpu_custom_call.1} parent=1 // loop_footer_branch
      %15 = sbr.rel target = $region3
    $region8: #{tpu_custom_call.1} parent=1 // loop_exit
      _
    %655 = vsyncpa [#allocation3], 1
    %s656 = scalar_lea.sflag [#allocation3], 1
    %657 = vsyncpa %s656, 1
    %658 = vsyncpa [#allocation4], 1
    %s659 = scalar_lea.sflag [#allocation4], 1
    %660 = vsyncpa %s659, 1

</llo_original>
